<compile_context>
chip_gen: v7x
topology: tpu7x:2x2x1
jax: 0.10.0
libtpu: 0.0.40
codegen_flags: <defaults>
</compile_context>

<pallas_src>
import jax
import jax.numpy as jnp
from jax.experimental import pallas as pl
from jax.experimental.pallas import tpu as pltpu

K1 = 8     # padded layer-1 contraction dim (true fan_in = 2)
FP = 128   # padded hidden feature dim (lane multiple)
FO = 8     # padded output dim (true fan_out = 1); keeps out writeback narrow


def mlp_kernel(x_ref, w1_ref, w2_ref, w3_ref, b12_ref, b3_ref, o_ref):
    # layer 1: Linear(2,4) + ReLU   (x: [bt, 8] @ w1: [8, 128])
    h1 = jnp.dot(x_ref[...], w1_ref[...], preferred_element_type=jnp.float32)
    h1 = jnp.maximum(h1 + b12_ref[0], 0.0)            # b12_ref[0]: [1,128] bcast
    # layer 2: Linear(4,4) + ReLU   ([bt,128] @ [128,128])
    h2 = jnp.dot(h1, w2_ref[...], preferred_element_type=jnp.float32)
    h2 = jnp.maximum(h2 + b12_ref[1], 0.0)
    # layer 3: Linear(4,1) -> narrow [bt, 8] output tile (lane 0 is real)
    o_ref[...] = (jnp.dot(h2, w3_ref[...], preferred_element_type=jnp.float32)
                  + b3_ref[...])


def _pad2d(a, rows, cols):
    r, c = a.shape
    return jnp.pad(a, ((0, rows - r), (0, cols - c)))


def prepare_params(params):
    """One-time packing/padding of MLP parameters into TPU-friendly tiles.

    Zero padding is numerically safe: padded rows/cols/biases contribute 0
    and ReLU(0) = 0.
    Returns (w1p [8,128], w2p [128,128], w3p [128,8], b12 [2,1,128], b3p [1,8]).
    """
    (w1, b1), (w2, b2), (w3, b3) = params
    f32 = jnp.float32
    w1p = _pad2d(w1.astype(f32), K1, FP)                                # [8, 128]
    w2p = _pad2d(w2.astype(f32), FP, FP)                                # [128, 128]
    w3p = _pad2d(w3.astype(f32), FP, FO)                                # [128, 8]
    b12 = jnp.stack([_pad2d(b1.reshape(1, -1).astype(f32), 1, FP),
                     _pad2d(b2.reshape(1, -1).astype(f32), 1, FP)])     # [2, 1, 128]
    b3p = _pad2d(b3.reshape(1, -1).astype(f32), 1, FO)                  # [1, 8]
    return w1p, w2p, w3p, b12, b3p


def _pick_bt(batch):
    # tiny batches: minimize fixed per-step + padding overhead;
    # large batches: amortize step cost, fill MXU sublanes (256 = v6e/v7x edge).
    return 8 if batch <= 64 else 256


def mynet_forward(x, prepared):
    """x: [B, 2] float32 -> [B, 1] float32, matching MyNet.forward / .test."""
    w1p, w2p, w3p, b12, b3p = prepared
    B, fin = x.shape
    bt = _pick_bt(B)
    bpad = -(-B // bt) * bt                                   # round B up to tile

    # per-call glue: only the activations get padded (single fused pad under jit)
    xp = jnp.pad(x.astype(jnp.float32), ((0, bpad - B), (0, K1 - fin)))  # [bpad, 8]

    out = pl.pallas_call(
        mlp_kernel,
        grid=(bpad // bt,),
        in_specs=[
            pl.BlockSpec((bt, K1), lambda i: (i, 0)),          # x tile per grid step
            pl.BlockSpec((K1, FP), lambda i: (0, 0)),          # w1: VMEM-resident
            pl.BlockSpec((FP, FP), lambda i: (0, 0)),          # w2: VMEM-resident
            pl.BlockSpec((FP, FO), lambda i: (0, 0)),          # w3 (narrow): resident
            pl.BlockSpec((2, 1, FP), lambda i: (0, 0, 0)),     # b1/b2, un-broadcast
            pl.BlockSpec((1, FO), lambda i: (0, 0)),           # b3, un-broadcast
        ],
        out_specs=pl.BlockSpec((bt, FO), lambda i: (i, 0)),
        out_shape=jax.ShapeDtypeStruct((bpad, FO), jnp.float32),
        compiler_params=pltpu.CompilerParams(
            dimension_semantics=("parallel",)),
    )(xp, w1p, w2p, w3p, b12, b3p)

    return out[:B, :1]


mynet_forward_jit = jax.jit(mynet_forward)


def init_params(key):
    """Deterministic init mimicking torch.nn.Linear defaults:
    U(-1/sqrt(fan_in), 1/sqrt(fan_in)) for both weight and bias."""
    dims = [(2, 4), (4, 4), (4, 1)]
    params = []
    for (fin, fout) in dims:
        key, kw, kb = jax.random.split(key, 3)
        bound = 1.0 / jnp.sqrt(fin)
        w = jax.random.uniform(kw, (fin, fout), jnp.float32, -bound, bound)
        b = jax.random.uniform(kb, (fout,), jnp.float32, -bound, bound)
        params.append((w, b))
    return params


def reference_forward(x, params):
    (w1, b1), (w2, b2), (w3, b3) = params
    h = jnp.maximum(x @ w1 + b1, 0.0)
    h = jnp.maximum(h @ w2 + b2, 0.0)
    return h @ w3 + b3


# TODO(synk): training path (Adam optimizer, MSELoss, train_model) is not part
# of the forward pass and is not implemented as a Pallas kernel.

if __name__ == "__main__":
    key = jax.random.PRNGKey(0)
    params = init_params(key)
    prepared = jax.tree_util.tree_map(jax.block_until_ready,
                                      prepare_params(params))

    # same test input as the PyTorch script: x = [[0.2,0.4],[0.2,0.3],[0.3,0.4]]
    x = jnp.array([[0.2, 0.4], [0.2, 0.3], [0.3, 0.4]], dtype=jnp.float32)

    out = jax.block_until_ready(mynet_forward_jit(x, prepared))
    ref = reference_forward(x, params)
    assert out.shape == (3, 1), out.shape
    assert jnp.allclose(out, ref, atol=1e-5, rtol=1e-5), (out, ref)

    # exercise the large-batch tile path (bt=256, multi-step parallel grid)
    key, kx = jax.random.split(key)
    xb = jax.random.uniform(kx, (600, 2), jnp.float32)
    outb = jax.block_until_ready(mynet_forward_jit(xb, prepared))
    refb = reference_forward(xb, params)
    assert outb.shape == (600, 1), outb.shape
    assert jnp.allclose(outb, refb, atol=1e-5, rtol=1e-5)

    print("KERNEL_OK")
</pallas_src>

<mosaic_0001>
module attributes {stable_mosaic.version = 11 : i64} {
  func.func @mlp_kernel(%arg0: i32, %arg1: memref<8x8xf32, #tpu.memory_space<vmem>>, %arg2: memref<8x128xf32, #tpu.memory_space<vmem>>, %arg3: memref<128x128xf32, #tpu.memory_space<vmem>>, %arg4: memref<128x8xf32, #tpu.memory_space<vmem>>, %arg5: memref<2x1x128xf32, #tpu.memory_space<vmem>>, %arg6: memref<1x8xf32, #tpu.memory_space<vmem>>, %arg7: memref<8x8xf32, #tpu.memory_space<vmem>>) attributes {dimension_semantics = [#tpu.dimension_semantics<parallel>], iteration_bounds = array<i64: 1>, scalar_prefetch = 0 : i64, scratch_operands = 0 : i64, tpu.core_type = #tpu.core_type<tc>, window_params = [{transform_indices = @transform_0, window_bounds = array<i64: 8, 8>}, {pipeline_mode = #tpu.pipeline_mode<synchronous>, transform_indices = @transform_1, window_bounds = array<i64: 8, 128>}, {pipeline_mode = #tpu.pipeline_mode<synchronous>, transform_indices = @transform_2, window_bounds = array<i64: 128, 128>}, {pipeline_mode = #tpu.pipeline_mode<synchronous>, transform_indices = @transform_3, window_bounds = array<i64: 128, 8>}, {pipeline_mode = #tpu.pipeline_mode<synchronous>, transform_indices = @transform_4, window_bounds = array<i64: 2, 1, 128>}, {pipeline_mode = #tpu.pipeline_mode<synchronous>, transform_indices = @transform_5, window_bounds = array<i64: 1, 8>}, {transform_indices = @transform_6, window_bounds = array<i64: 8, 8>}]} {
    %c0 = arith.constant 0 : index
    %c0_0 = arith.constant 0 : index
    %0 = vector.load %arg1[%c0, %c0_0] : memref<8x8xf32, #tpu.memory_space<vmem>>, vector<8x8xf32>
    %c0_1 = arith.constant 0 : index
    %c0_2 = arith.constant 0 : index
    %1 = vector.load %arg2[%c0_1, %c0_2] : memref<8x128xf32, #tpu.memory_space<vmem>>, vector<8x128xf32>
    %cst = arith.constant dense<0.000000e+00> : vector<8x128xf32>
    %2 = tpu.matmul %0, %1, %cst {dimension_numbers = #tpu.dot_dimension_numbers<[1], [0], [0], [1], [0, 0, 1, 1], [], []>} : vector<8x8xf32>, vector<8x128xf32>, vector<8x128xf32> -> vector<8x128xf32>
    %c0_3 = arith.constant 0 : index
    %c0_4 = arith.constant 0 : index
    %c0_5 = arith.constant 0 : index
    %3 = vector.load %arg5[%c0_3, %c0_4, %c0_5] : memref<2x1x128xf32, #tpu.memory_space<vmem>>, vector<1x1x128xf32>
    %4 = vector.shape_cast %3 : vector<1x1x128xf32> to vector<1x128xf32>
    %5 = vector.broadcast %4 : vector<1x128xf32> to vector<8x128xf32>
    %6 = arith.addf %2, %5 : vector<8x128xf32>
    %cst_6 = arith.constant 0.000000e+00 : f32
    %7 = vector.broadcast %cst_6 : f32 to vector<8x128xf32>
    %8 = arith.maximumf %6, %7 : vector<8x128xf32>
    %c0_7 = arith.constant 0 : index
    %c0_8 = arith.constant 0 : index
    %9 = vector.load %arg3[%c0_7, %c0_8] : memref<128x128xf32, #tpu.memory_space<vmem>>, vector<128x128xf32>
    %cst_9 = arith.constant dense<0.000000e+00> : vector<8x128xf32>
    %10 = tpu.matmul %8, %9, %cst_9 {dimension_numbers = #tpu.dot_dimension_numbers<[1], [0], [0], [1], [0, 0, 1, 1], [], []>} : vector<8x128xf32>, vector<128x128xf32>, vector<8x128xf32> -> vector<8x128xf32>
    %c1 = arith.constant 1 : index
    %c0_10 = arith.constant 0 : index
    %c0_11 = arith.constant 0 : index
    %11 = vector.load %arg5[%c1, %c0_10, %c0_11] : memref<2x1x128xf32, #tpu.memory_space<vmem>>, vector<1x1x128xf32>
    %12 = vector.shape_cast %11 : vector<1x1x128xf32> to vector<1x128xf32>
    %13 = vector.broadcast %12 : vector<1x128xf32> to vector<8x128xf32>
    %14 = arith.addf %10, %13 : vector<8x128xf32>
    %cst_12 = arith.constant 0.000000e+00 : f32
    %15 = vector.broadcast %cst_12 : f32 to vector<8x128xf32>
    %16 = arith.maximumf %14, %15 : vector<8x128xf32>
    %c0_13 = arith.constant 0 : index
    %c0_14 = arith.constant 0 : index
    %17 = vector.load %arg4[%c0_13, %c0_14] : memref<128x8xf32, #tpu.memory_space<vmem>>, vector<128x8xf32>
    %cst_15 = arith.constant dense<0.000000e+00> : vector<8x8xf32>
    %18 = tpu.matmul %16, %17, %cst_15 {dimension_numbers = #tpu.dot_dimension_numbers<[1], [0], [0], [1], [0, 0, 1, 1], [], []>} : vector<8x128xf32>, vector<128x8xf32>, vector<8x8xf32> -> vector<8x8xf32>
    %c0_16 = arith.constant 0 : index
    %c0_17 = arith.constant 0 : index
    %19 = vector.load %arg6[%c0_16, %c0_17] : memref<1x8xf32, #tpu.memory_space<vmem>>, vector<1x8xf32>
    %20 = vector.broadcast %19 : vector<1x8xf32> to vector<8x8xf32>
    %21 = arith.addf %18, %20 : vector<8x8xf32>
    %c0_18 = arith.constant 0 : index
    %c0_19 = arith.constant 0 : index
    %22 = vector.load %arg7[%c0_18, %c0_19] : memref<8x8xf32, #tpu.memory_space<vmem>>, vector<8x8xf32>
    tpu.vector_store %arg7[%c0_18, %c0_19], %21 {strides = array<i32>} : memref<8x8xf32, #tpu.memory_space<vmem>>, vector<8x8xf32>,
    return
  }
  func.func @transform_0(%arg0: i32) -> (i32, i32) {
    %c0_i32 = arith.constant 0 : i32
    %c0_i32_0 = arith.constant 0 : i32
    return %arg0, %c0_i32 : i32, i32
  }
  func.func @transform_1(%arg0: i32) -> (i32, i32) {
    %c0_i32 = arith.constant 0 : i32
    %c0_i32_0 = arith.constant 0 : i32
    %c0_i32_1 = arith.constant 0 : i32
    return %c0_i32, %c0_i32_0 : i32, i32
  }
  func.func @transform_2(%arg0: i32) -> (i32, i32) {
    %c0_i32 = arith.constant 0 : i32
    %c0_i32_0 = arith.constant 0 : i32
    %c0_i32_1 = arith.constant 0 : i32
    return %c0_i32, %c0_i32_0 : i32, i32
  }
  func.func @transform_3(%arg0: i32) -> (i32, i32) {
    %c0_i32 = arith.constant 0 : i32
    %c0_i32_0 = arith.constant 0 : i32
    %c0_i32_1 = arith.constant 0 : i32
    return %c0_i32, %c0_i32_0 : i32, i32
  }
  func.func @transform_4(%arg0: i32) -> (i32, i32, i32) {
    %c0_i32 = arith.constant 0 : i32
    %c0_i32_0 = arith.constant 0 : i32
    %c0_i32_1 = arith.constant 0 : i32
    %c0_i32_2 = arith.constant 0 : i32
    return %c0_i32, %c0_i32_0, %c0_i32_1 : i32, i32, i32
  }
  func.func @transform_5(%arg0: i32) -> (i32, i32) {
    %c0_i32 = arith.constant 0 : i32
    %c0_i32_0 = arith.constant 0 : i32
    %c0_i32_1 = arith.constant 0 : i32
    return %c0_i32, %c0_i32_0 : i32, i32
  }
  func.func @transform_6(%arg0: i32) -> (i32, i32) {
    %c0_i32 = arith.constant 0 : i32
    %c0_i32_0 = arith.constant 0 : i32
    return %arg0, %c0_i32 : i32, i32
  }
}

</mosaic_0001>

<llo_original>
// kernel: mynet_forward.1
$region0: #{mynet_forward.1}
  #allocation0 [shape = 'u32[]', space=smem, size = 0x4, offset = 0x4, fixed_abs, tag = 'smem constant byte address 0x4 - core index']
  #allocation1 [shape = 'u32[144,128]{1,0:T(1,128)}', space=vmem, size = 0x12000, scoped, tag = 'internal scratch']
  %s0 = inlined_call_operand.vmem [shape: f32[8,8], index: 0, kind: input, shape index: {}]
  %s1 = inlined_call_operand.vmem [shape: f32[8,128], index: 1, kind: input, shape index: {}]
  %s2 = inlined_call_operand.vmem [shape: f32[128,128], index: 2, kind: input, shape index: {}]
  %s3 = inlined_call_operand.vmem [shape: f32[128,8], index: 3, kind: input, shape index: {}]
  %s4 = inlined_call_operand.vmem [shape: f32[2,1,128], index: 4, kind: input, shape index: {}]
  %s5 = inlined_call_operand.vmem [shape: f32[1,8], index: 5, kind: input, shape index: {}]
  %s6 = inlined_call_operand.vmem [shape: f32[8,8], index: 6, kind: output, shape index: {}]
  %s7 = sld [smem:[#allocation0]]
  $region34: #{mynet_forward.1} parent=0
    _
  %s9 = ssub.s32 1, %s7
  %s10 = scalar_select 0, %s9, %s7
  // Predicated region
  $region2: #{mynet_forward.1} parent=0 // pred_check
    _
  $region3: #{mynet_forward.1} parent=0 // pred_check_branch
    %12 = sbr.rel (0) target = $region5
  $region4: #{mynet_forward.1} parent=0 // pred_region
    _
  $region5: #{mynet_forward.1} parent=0 // pred_fallthru
    _
  // Predicated region
  $region6: #{mynet_forward.1} parent=0 // pred_check
    _
  $region7: #{mynet_forward.1} parent=0 // pred_check_branch
    %14 = sbr.rel (0) target = $region9
  $region8: #{mynet_forward.1} parent=0 // pred_region
    _
  $region9: #{mynet_forward.1} parent=0 // pred_fallthru
    _
  // Predicated region
  $region10: #{mynet_forward.1} parent=0 // pred_check
    _
  $region11: #{mynet_forward.1} parent=0 // pred_check_branch
    %16 = sbr.rel (0) target = $region13
  $region12: #{mynet_forward.1} parent=0 // pred_region
    _
  $region13: #{mynet_forward.1} parent=0 // pred_fallthru
    _
  // Predicated region
  $region14: #{mynet_forward.1} parent=0 // pred_check
    _
  $region15: #{mynet_forward.1} parent=0 // pred_check_branch
    %18 = sbr.rel (0) target = $region17
  $region16: #{mynet_forward.1} parent=0 // pred_region
    _
  $region17: #{mynet_forward.1} parent=0 // pred_fallthru
    _
  // Predicated region
  $region18: #{mynet_forward.1} parent=0 // pred_check
    _
  $region19: #{mynet_forward.1} parent=0 // pred_check_branch
    %20 = sbr.rel (0) target = $region21
  $region20: #{mynet_forward.1} parent=0 // pred_region
    _
  $region21: #{mynet_forward.1} parent=0 // pred_fallthru
    _
  // Predicated region
  $region22: #{mynet_forward.1} parent=0 // pred_check
    _
  $region23: #{mynet_forward.1} parent=0 // pred_check_branch
    %22 = sbr.rel (0) target = $region25
  $region24: #{mynet_forward.1} parent=0 // pred_region
    _
  $region25: #{mynet_forward.1} parent=0 // pred_fallthru
    _
  %v23 = vld [vmem:[%s0] sm:$0xff]
  %v24 = vld [vmem:[%s1] sm:$0xff]
  %v25 = vld [vmem:[%s4] sm:$0x1]
  %v27 = vlaneseq
  %v28 = vshrl.u32 %v27, 7
  %v29 = vsub.s32 0, %v28
  %v30 = vrot.slane %v25, %v29
  %vm32 = vcmask 64512
  %v34 = vsel %vm32, %v23, 0
  %36 = vmatprep.subr.mxu0 0.0
  %37 = vmatpush1.msra.mxu0 %v24
  %38 = vmatprep.subr.mxu0 0.0
  %39 = vmatpush1.msra.mxu0 0.0
  %40 = vmatprep.subr.mxu0 0.0
  %41 = vmatpush1.msra.mxu0 0.0
  %42 = vmatprep.subr.mxu0 0.0
  %43 = vmatpush1.msra.mxu0 0.0
  %44 = vmatprep.subr.mxu0 0.0
  %45 = vmatpush1.msra.mxu0 0.0
  %46 = vmatprep.subr.mxu0 0.0
  %47 = vmatpush1.msra.mxu0 0.0
  %48 = vmatprep.subr.mxu0 0.0
  %49 = vmatpush1.msra.mxu0 0.0
  %50 = vmatprep.subr.mxu0 0.0
  %51 = vmatpush1.msra.mxu0 0.0
  %52 = vmatprep.subr.mxu0 0.0
  %53 = vmatpush1.msra.mxu0 0.0
  %54 = vmatprep.subr.mxu0 0.0
  %55 = vmatpush1.msra.mxu0 0.0
  %56 = vmatprep.subr.mxu0 0.0
  %57 = vmatpush1.msra.mxu0 0.0
  %58 = vmatprep.subr.mxu0 0.0
  %59 = vmatpush1.msra.mxu0 0.0
  %60 = vmatprep.subr.mxu0 0.0
  %61 = vmatpush1.msra.mxu0 0.0
  %62 = vmatprep.subr.mxu0 0.0
  %63 = vmatpush1.msra.mxu0 0.0
  %64 = vmatprep.subr.mxu0 0.0
  %65 = vmatpush1.msra.mxu0 0.0
  %66 = vmatprep.subr.mxu0 0.0
  %67 = vmatpush1.msra.mxu0 0.0
  %68 = vmatprep.subr.mxu0 0.0
  %69 = vmatpush1.msra.mxu0 0.0
  %70 = vmatprep.subr.mxu0 0.0
  %71 = vmatpush1.msra.mxu0 0.0
  %72 = vmatprep.subr.mxu0 0.0
  %73 = vmatpush1.msra.mxu0 0.0
  %74 = vmatprep.subr.mxu0 0.0
  %75 = vmatpush1.msra.mxu0 0.0
  %76 = vmatprep.subr.mxu0 0.0
  %77 = vmatpush1.msra.mxu0 0.0
  %78 = vmatprep.subr.mxu0 0.0
  %79 = vmatpush1.msra.mxu0 0.0
  %80 = vmatprep.subr.mxu0 0.0
  %81 = vmatpush1.msra.mxu0 0.0
  %82 = vmatprep.subr.mxu0 0.0
  %83 = vmatpush1.msra.mxu0 0.0
  %84 = vmatprep.subr.mxu0 0.0
  %85 = vmatpush1.msra.mxu0 0.0
  %86 = vmatprep.subr.mxu0 0.0
  %87 = vmatpush1.msra.mxu0 0.0
  %88 = vmatprep.subr.mxu0 0.0
  %89 = vmatpush1.msra.mxu0 0.0
  %90 = vmatprep.subr.mxu0 0.0
  %91 = vmatpush1.msra.mxu0 0.0
  %92 = vmatprep.subr.mxu0 0.0
  %93 = vmatpush1.msra.mxu0 0.0
  %94 = vmatprep.subr.mxu0 0.0
  %95 = vmatpush1.msra.mxu0 0.0
  %96 = vmatprep.subr.mxu0 0.0
  %97 = vmatpush1.msra.mxu0 0.0
  %98 = vmatprep.subr.mxu0 0.0
  %99 = vmatpush1.msra.mxu0 0.0
  %100 = vmatprep.mubr.f32.mxu0 0.0
  %101 = vmatmul.mubr.f32.gmra.mrb[0].mxu0 %v34
  %v102 = vpop.f32.mrb[0].mxu0
  %v103 = vadd.f32 %v30, %v102
  %v104 = vpop.f32.mrb[0].mxu0
  %105 = vdwg.mxu0
  %v106 = vmax.f32 %v103, 0.0
  %v107 = vld [vmem:[%s2] sm:$0xff]
  %v108 = vld [vmem:[%s2 + $0x8] sm:$0xff]
  %v109 = vld [vmem:[%s2 + $0x10] sm:$0xff]
  %v110 = vld [vmem:[%s2 + $0x18] sm:$0xff]
  %v111 = vld [vmem:[%s2 + $0x20] sm:$0xff]
  %v112 = vld [vmem:[%s2 + $0x28] sm:$0xff]
  %v113 = vld [vmem:[%s2 + $0x30] sm:$0xff]
  %v114 = vld [vmem:[%s2 + $0x38] sm:$0xff]
  %v115 = vld [vmem:[%s2 + $0x40] sm:$0xff]
  %v116 = vld [vmem:[%s2 + $0x48] sm:$0xff]
  %v117 = vld [vmem:[%s2 + $0x50] sm:$0xff]
  %v118 = vld [vmem:[%s2 + $0x58] sm:$0xff]
  %v119 = vld [vmem:[%s2 + $0x60] sm:$0xff]
  %v120 = vld [vmem:[%s2 + $0x68] sm:$0xff]
  %v121 = vld [vmem:[%s2 + $0x70] sm:$0xff]
  %v122 = vld [vmem:[%s2 + $0x78] sm:$0xff]
  %s123 = scalar_lea.vmem %s4, 1
  %v124 = vld [vmem:[%s123] sm:$0x1]
  %v126 = vlaneseq
  %v127 = vshrl.u32 %v126, 7
  %v128 = vsub.s32 0, %v127
  %v129 = vrot.slane %v124, %v128
  %131 = vmatprep.subr.mxu0 0.0
  %132 = vmatpush1.msra.mxu0 %v107
  %133 = vmatprep.subr.mxu0 0.0
  %134 = vmatpush1.msra.mxu0 %v108
  %135 = vmatprep.subr.mxu0 0.0
  %136 = vmatpush1.msra.mxu0 %v109
  %137 = vmatprep.subr.mxu0 0.0
  %138 = vmatpush1.msra.mxu0 %v110
  %139 = vmatprep.subr.mxu0 0.0
  %140 = vmatpush1.msra.mxu0 %v111
  %141 = vmatprep.subr.mxu0 0.0
  %142 = vmatpush1.msra.mxu0 %v112
  %143 = vmatprep.subr.mxu0 0.0
  %144 = vmatpush1.msra.mxu0 %v113
  %145 = vmatprep.subr.mxu0 0.0
  %146 = vmatpush1.msra.mxu0 %v114
  %147 = vmatprep.subr.mxu0 0.0
  %148 = vmatpush1.msra.mxu0 %v115
  %149 = vmatprep.subr.mxu0 0.0
  %150 = vmatpush1.msra.mxu0 %v116
  %151 = vmatprep.subr.mxu0 0.0
  %152 = vmatpush1.msra.mxu0 %v117
  %153 = vmatprep.subr.mxu0 0.0
  %154 = vmatpush1.msra.mxu0 %v118
  %155 = vmatprep.subr.mxu0 0.0
  %156 = vmatpush1.msra.mxu0 %v119
  %157 = vmatprep.subr.mxu0 0.0
  %158 = vmatpush1.msra.mxu0 %v120
  %159 = vmatprep.subr.mxu0 0.0
  %160 = vmatpush1.msra.mxu0 %v121
  %161 = vmatprep.subr.mxu0 0.0
  %162 = vmatpush1.msra.mxu0 %v122
  %163 = vmatprep.subr.mxu0 0.0
  %164 = vmatpush1.msra.mxu0 0.0
  %165 = vmatprep.subr.mxu0 0.0
  %166 = vmatpush1.msra.mxu0 0.0
  %167 = vmatprep.subr.mxu0 0.0
  %168 = vmatpush1.msra.mxu0 0.0
  %169 = vmatprep.subr.mxu0 0.0
  %170 = vmatpush1.msra.mxu0 0.0
  %171 = vmatprep.subr.mxu0 0.0
  %172 = vmatpush1.msra.mxu0 0.0
  %173 = vmatprep.subr.mxu0 0.0
  %174 = vmatpush1.msra.mxu0 0.0
  %175 = vmatprep.subr.mxu0 0.0
  %176 = vmatpush1.msra.mxu0 0.0
  %177 = vmatprep.subr.mxu0 0.0
  %178 = vmatpush1.msra.mxu0 0.0
  %179 = vmatprep.subr.mxu0 0.0
  %180 = vmatpush1.msra.mxu0 0.0
  %181 = vmatprep.subr.mxu0 0.0
  %182 = vmatpush1.msra.mxu0 0.0
  %183 = vmatprep.subr.mxu0 0.0
  %184 = vmatpush1.msra.mxu0 0.0
  %185 = vmatprep.subr.mxu0 0.0
  %186 = vmatpush1.msra.mxu0 0.0
  %187 = vmatprep.subr.mxu0 0.0
  %188 = vmatpush1.msra.mxu0 0.0
  %189 = vmatprep.subr.mxu0 0.0
  %190 = vmatpush1.msra.mxu0 0.0
  %191 = vmatprep.subr.mxu0 0.0
  %192 = vmatpush1.msra.mxu0 0.0
  %193 = vmatprep.subr.mxu0 0.0
  %194 = vmatpush1.msra.mxu0 0.0
  %195 = vmatprep.mubr.f32.mxu0 0.0
  %196 = vmatmul.mubr.f32.gmra.mrb[0].mxu0 %v106
  %v197 = vpop.f32.mrb[0].mxu0
  %v198 = vadd.f32 %v129, %v197
  %v199 = vpop.f32.mrb[0].mxu0
  %200 = vdwg.mxu0
  %v201 = vmax.f32 %v198, 0.0
  %v202 = vld [vmem:[%s3] sm:$0xff]
  %v203 = vld [vmem:[%s3 + $0x8] sm:$0xff]
  %v204 = vld [vmem:[%s3 + $0x10] sm:$0xff]
  %v205 = vld [vmem:[%s3 + $0x18] sm:$0xff]
  %v206 = vld [vmem:[%s3 + $0x20] sm:$0xff]
  %v207 = vld [vmem:[%s3 + $0x28] sm:$0xff]
  %v208 = vld [vmem:[%s3 + $0x30] sm:$0xff]
  %v209 = vld [vmem:[%s3 + $0x38] sm:$0xff]
  %v210 = vld [vmem:[%s3 + $0x40] sm:$0xff]
  %v211 = vld [vmem:[%s3 + $0x48] sm:$0xff]
  %v212 = vld [vmem:[%s3 + $0x50] sm:$0xff]
  %v213 = vld [vmem:[%s3 + $0x58] sm:$0xff]
  %v214 = vld [vmem:[%s3 + $0x60] sm:$0xff]
  %v215 = vld [vmem:[%s3 + $0x68] sm:$0xff]
  %v216 = vld [vmem:[%s3 + $0x70] sm:$0xff]
  %v217 = vld [vmem:[%s3 + $0x78] sm:$0xff]
  %v218 = vld [vmem:[%s5] sm:$0x1]
  %v220 = vlaneseq
  %v221 = vshrl.u32 %v220, 7
  %v222 = vsub.s32 0, %v221
  %v223 = vrot.slane %v218, %v222
  %225 = vmatprep.subr.mxu0 0.0
  %226 = vmatpush1.msra.mxu0 %v202
  %227 = vmatprep.subr.mxu0 0.0
  %228 = vmatpush1.msra.mxu0 %v203
  %229 = vmatprep.subr.mxu0 0.0
  %230 = vmatpush1.msra.mxu0 %v204
  %231 = vmatprep.subr.mxu0 0.0
  %232 = vmatpush1.msra.mxu0 %v205
  %233 = vmatprep.subr.mxu0 0.0
  %234 = vmatpush1.msra.mxu0 %v206
  %235 = vmatprep.subr.mxu0 0.0
  %236 = vmatpush1.msra.mxu0 %v207
  %237 = vmatprep.subr.mxu0 0.0
  %238 = vmatpush1.msra.mxu0 %v208
  %239 = vmatprep.subr.mxu0 0.0
  %240 = vmatpush1.msra.mxu0 %v209
  %241 = vmatprep.subr.mxu0 0.0
  %242 = vmatpush1.msra.mxu0 %v210
  %243 = vmatprep.subr.mxu0 0.0
  %244 = vmatpush1.msra.mxu0 %v211
  %245 = vmatprep.subr.mxu0 0.0
  %246 = vmatpush1.msra.mxu0 %v212
  %247 = vmatprep.subr.mxu0 0.0
  %248 = vmatpush1.msra.mxu0 %v213
  %249 = vmatprep.subr.mxu0 0.0
  %250 = vmatpush1.msra.mxu0 %v214
  %251 = vmatprep.subr.mxu0 0.0
  %252 = vmatpush1.msra.mxu0 %v215
  %253 = vmatprep.subr.mxu0 0.0
  %254 = vmatpush1.msra.mxu0 %v216
  %255 = vmatprep.subr.mxu0 0.0
  %256 = vmatpush1.msra.mxu0 %v217
  %257 = vmatprep.subr.mxu0 0.0
  %258 = vmatpush1.msra.mxu0 0.0
  %259 = vmatprep.subr.mxu0 0.0
  %260 = vmatpush1.msra.mxu0 0.0
  %261 = vmatprep.subr.mxu0 0.0
  %262 = vmatpush1.msra.mxu0 0.0
  %263 = vmatprep.subr.mxu0 0.0
  %264 = vmatpush1.msra.mxu0 0.0
  %265 = vmatprep.subr.mxu0 0.0
  %266 = vmatpush1.msra.mxu0 0.0
  %267 = vmatprep.subr.mxu0 0.0
  %268 = vmatpush1.msra.mxu0 0.0
  %269 = vmatprep.subr.mxu0 0.0
  %270 = vmatpush1.msra.mxu0 0.0
  %271 = vmatprep.subr.mxu0 0.0
  %272 = vmatpush1.msra.mxu0 0.0
  %273 = vmatprep.subr.mxu0 0.0
  %274 = vmatpush1.msra.mxu0 0.0
  %275 = vmatprep.subr.mxu0 0.0
  %276 = vmatpush1.msra.mxu0 0.0
  %277 = vmatprep.subr.mxu0 0.0
  %278 = vmatpush1.msra.mxu0 0.0
  %279 = vmatprep.subr.mxu0 0.0
  %280 = vmatpush1.msra.mxu0 0.0
  %281 = vmatprep.subr.mxu0 0.0
  %282 = vmatpush1.msra.mxu0 0.0
  %283 = vmatprep.subr.mxu0 0.0
  %284 = vmatpush1.msra.mxu0 0.0
  %285 = vmatprep.subr.mxu0 0.0
  %286 = vmatpush1.msra.mxu0 0.0
  %287 = vmatprep.subr.mxu0 0.0
  %288 = vmatpush1.msra.mxu0 0.0
  %289 = vmatprep.mubr.f32.mxu0 0.0
  %290 = vmatmul.mubr.f32.gmra.mrb[0].mxu0 %v201
  %v291 = vpop.f32.mrb[0].mxu0
  %v292 = vadd.f32 %v223, %v291
  %v293 = vpop.f32.mrb[0].mxu0
  %294 = vdwg.mxu0
  %295 = vst.msk [vmem:[%s6] sm:$0xff] %vm32, %v292
  // Predicated region
  $region26: #{mynet_forward.1} parent=0 // pred_check
    _
  $region27: #{mynet_forward.1} parent=0 // pred_check_branch
    %297 = sbr.rel (0) target = $region29
  $region28: #{mynet_forward.1} parent=0 // pred_region
    _
  $region29: #{mynet_forward.1} parent=0 // pred_fallthru
    _
  // Predicated region
  $region30: #{mynet_forward.1} parent=0 // pred_check
    _
  $region31: #{mynet_forward.1} parent=0 // pred_check_branch
    %299 = sbr.rel (0) target = $region33
  $region32: #{mynet_forward.1} parent=0 // pred_region
    _
  $region33: #{mynet_forward.1} parent=0 // pred_fallthru
    _

</llo_original>
